<compile_context>
chip_gen: v5e
topology: v5e:2x2
jax: 0.10.0
libtpu: 0.0.40
codegen_flags: <defaults>
</compile_context>

<pallas_src>
import jax
import jax.numpy as jnp
from jax.experimental import pallas as pl
from jax.experimental.pallas import tpu as pltpu

# ---- model hyper-parameters (synthetic, small) --------------------------------
B = 2            # batch
C_IN = 3         # in_channels (Net2D default)
H = W = 16       # spatial
DIM_FEATS = 32   # backbone feature dim (dim_feats)
NUM_CLASSES = 5  # num_classes
KH = KW = 3      # conv kernel


def net2d_forward(x_nchw, wconv, bconv, wlin, blin):
    """x_nchw: (B, C_IN, H, W) float32. Returns (B, NUM_CLASSES) or (B,) if NUM_CLASSES==1."""
    b, c, h, w = x_nchw.shape
    kh, kw, _, dim_feats = wconv.shape
    num_classes = wlin.shape[-1]
    hw = h * w

    def kernel(patches_ref, wconv_ref, bconv_ref, wlin_ref, blin_ref, out_ref,
               feats_scr):
        # patches_ref: (K, B*H*W) bf16   im2col patches, lane-dense, K = kh*kw*c
        # wconv_ref  : (F, K)     bf16   conv weight, im2col-flattened, transposed
        # bconv_ref  : (F, 1)     f32    conv bias (broadcast add over lanes)
        # wlin_ref   : (NC, F)    f32    head weight^T, pre-scaled by 1/(H*W)
        # blin_ref   : (NC, 1)    f32    head bias
        # out_ref    : (NC, B)    f32    logits (transposed; wrapper flips back)
        # feats_scr  : (F, B)     f32    VMEM scratch for pooled features

        # 3x3 'same' conv as ONE bf16 MXU matmul -> f32, lane-dense activations
        acc = jnp.dot(wconv_ref[...], patches_ref[...],
                      preferred_element_type=jnp.float32)       # (F, B*H*W)
        acc = jnp.maximum(acc + bconv_ref[...], 0.0)             # bias + ReLU (VPU)

        # 'avg' pooling (AdaptiveAvgPool2d(1)) + .view(B, -1): per-sample lane
        # reduction over each 128-aligned HW slab; 1/(H*W) is folded into wlin.
        for s in range(b):
            pooled = jnp.sum(acc[:, s * hw:(s + 1) * hw], axis=-1, keepdims=True)
            feats_scr[:, s:s + 1] = pooled                       # (F, 1)

        # dropout: nn.Dropout in eval mode is identity (msdo=False path).
        # TODO(synk): training-mode dropout / multisample dropout not implemented.

        # Linear head: (NC, F) @ (F, B) + bias
        out = jnp.dot(wlin_ref[...], feats_scr[...],
                      preferred_element_type=jnp.float32)
        out_ref[...] = (out + blin_ref[...]).astype(out_ref.dtype)

    # ---- wrapper glue (fused by XLA): build lane-dense im2col directly ---------
    # One small (C,B) swap of the raw input; taps then reshape straight into
    # (C, B*H*W) with column index = b*HW + y*W + x, rows ordered (i, j, c).
    x_cbhw = jnp.transpose(x_nchw.astype(jnp.bfloat16), (1, 0, 2, 3))  # (C,B,H,W)
    x_pad = jnp.pad(x_cbhw, ((0, 0), (0, 0), (1, 1), (1, 1)))
    taps = [x_pad[:, :, i:i + h, j:j + w].reshape(c, b * hw)
            for i in range(kh) for j in range(kw)]
    patches_t = jnp.concatenate(taps, axis=0)                    # (K, B*H*W) bf16

    wconv_t = wconv.reshape(kh * kw * c, dim_feats).T.astype(jnp.bfloat16)  # (F, K)
    bconv_col = bconv.reshape(dim_feats, 1)                      # (F, 1) f32
    wlin_t = (wlin / float(hw)).T                                # (NC, F) f32, pool scale folded
    blin_col = blin.reshape(num_classes, 1)                      # (NC, 1) f32

    vmem = pl.BlockSpec(memory_space=pltpu.MemorySpace.VMEM)
    out_t = pl.pallas_call(
        kernel,
        out_shape=jax.ShapeDtypeStruct((num_classes, b), jnp.float32),
        in_specs=[vmem, vmem, vmem, vmem, vmem],
        out_specs=vmem,
        scratch_shapes=[pltpu.VMEM((dim_feats, b), jnp.float32)],
    )(patches_t, wconv_t, bconv_col, wlin_t, blin_col)

    out = out_t.T                                                # (B, NC), tiny
    # Net2D: return out[:, 0] if linear.out_features == 1 else out
    if num_classes == 1:
        return out[:, 0]
    return out


def init_params(key):
    k1, k2, k3, k4 = jax.random.split(key, 4)
    wconv = jax.random.normal(k1, (KH, KW, C_IN, DIM_FEATS), jnp.float32) * 0.1
    bconv = jax.random.normal(k2, (1, DIM_FEATS), jnp.float32) * 0.01
    wlin = jax.random.normal(k3, (DIM_FEATS, NUM_CLASSES), jnp.float32) * 0.1
    blin = jax.random.normal(k4, (1, NUM_CLASSES), jnp.float32) * 0.01
    return wconv, bconv, wlin, blin


if __name__ == "__main__":
    key = jax.random.PRNGKey(0)
    kx, kp = jax.random.split(key)
    x = jax.random.normal(kx, (B, C_IN, H, W), jnp.float32)  # NCHW like PyTorch
    wconv, bconv, wlin, blin = init_params(kp)

    out = net2d_forward(x, wconv, bconv, wlin, blin)
    out = jax.block_until_ready(out)

    # sanity: reference in plain JAX (f32; kernel uses bf16 conv operands, so
    # tolerance is loosened per review)
    x_nhwc = jnp.transpose(x, (0, 2, 3, 1))
    conv = jax.lax.conv_general_dilated(
        x_nhwc, wconv, window_strides=(1, 1), padding="SAME",
        dimension_numbers=("NHWC", "HWIO", "NHWC"))
    feat = jnp.mean(jax.nn.relu(conv + bconv[0]), axis=(1, 2))
    ref = feat @ wlin + blin[0]
    assert jnp.allclose(out, ref, atol=1e-2, rtol=1e-2), (out, ref)

    print("KERNEL_OK")
</pallas_src>

<mosaic_0001>
module attributes {stable_mosaic.version = 11 : i64} {
  func.func @kernel(%arg0: memref<27x512xbf16, #tpu.memory_space<vmem>>, %arg1: memref<32x27xbf16, #tpu.memory_space<vmem>>, %arg2: memref<32x1xf32, #tpu.memory_space<vmem>>, %arg3: memref<5x32xf32, #tpu.memory_space<vmem>>, %arg4: memref<5x1xf32, #tpu.memory_space<vmem>>, %arg5: memref<5x2xf32, #tpu.memory_space<vmem>>, %arg6: memref<32x2xf32, #tpu.memory_space<vmem>>) attributes {dimension_semantics = [], scalar_prefetch = 0 : i64, scratch_operands = 1 : i64, tpu.core_type = #tpu.core_type<tc>} {
    %c0 = arith.constant 0 : index
    %c0_0 = arith.constant 0 : index
    %0 = vector.load %arg1[%c0, %c0_0] : memref<32x27xbf16, #tpu.memory_space<vmem>>, vector<32x27xbf16>
    %c0_1 = arith.constant 0 : index
    %c0_2 = arith.constant 0 : index
    %1 = vector.load %arg0[%c0_1, %c0_2] : memref<27x512xbf16, #tpu.memory_space<vmem>>, vector<27x512xbf16>
    %cst = arith.constant dense<0.000000e+00> : vector<32x512xf32>
    %2 = tpu.matmul %0, %1, %cst {dimension_numbers = #tpu.dot_dimension_numbers<[1], [0], [0], [1], [0, 0, 1, 1], [], []>} : vector<32x27xbf16>, vector<27x512xbf16>, vector<32x512xf32> -> vector<32x512xf32>
    %c0_3 = arith.constant 0 : index
    %c0_4 = arith.constant 0 : index
    %3 = vector.load %arg2[%c0_3, %c0_4] : memref<32x1xf32, #tpu.memory_space<vmem>>, vector<32x1xf32>
    %4 = vector.broadcast %3 : vector<32x1xf32> to vector<32x512xf32>
    %5 = arith.addf %2, %4 : vector<32x512xf32>
    %cst_5 = arith.constant 0.000000e+00 : f32
    %6 = vector.broadcast %cst_5 : f32 to vector<32x512xf32>
    %7 = arith.maximumf %5, %6 : vector<32x512xf32>
    %8 = vector.extract_strided_slice %7 {offsets = [0, 0], sizes = [32, 256], strides = [1, 1]} : vector<32x512xf32> to vector<32x256xf32>
    %cst_6 = arith.constant dense<0.000000e+00> : vector<32xf32>
    %9 = vector.multi_reduction <add>, %8, %cst_6 [1] : vector<32x256xf32> to vector<32xf32>
    %10 = vector.shape_cast %9 : vector<32xf32> to vector<32x1xf32>
    %c0_7 = arith.constant 0 : index
    %c0_8 = arith.constant 0 : index
    %11 = vector.load %arg6[%c0_7, %c0_8] : memref<32x2xf32, #tpu.memory_space<vmem>>, vector<32x1xf32>
    tpu.vector_store %arg6[%c0_7, %c0_8], %10 {strides = array<i32>} : memref<32x2xf32, #tpu.memory_space<vmem>>, vector<32x1xf32>,
    %12 = vector.extract_strided_slice %7 {offsets = [0, 256], sizes = [32, 256], strides = [1, 1]} : vector<32x512xf32> to vector<32x256xf32>
    %cst_9 = arith.constant dense<0.000000e+00> : vector<32xf32>
    %13 = vector.multi_reduction <add>, %12, %cst_9 [1] : vector<32x256xf32> to vector<32xf32>
    %14 = vector.shape_cast %13 : vector<32xf32> to vector<32x1xf32>
    %c0_10 = arith.constant 0 : index
    %c1 = arith.constant 1 : index
    %15 = vector.load %arg6[%c0_10, %c1] : memref<32x2xf32, #tpu.memory_space<vmem>>, vector<32x1xf32>
    tpu.vector_store %arg6[%c0_10, %c1], %14 {strides = array<i32>} : memref<32x2xf32, #tpu.memory_space<vmem>>, vector<32x1xf32>,
    %c0_11 = arith.constant 0 : index
    %c0_12 = arith.constant 0 : index
    %16 = vector.load %arg3[%c0_11, %c0_12] : memref<5x32xf32, #tpu.memory_space<vmem>>, vector<5x32xf32>
    %c0_13 = arith.constant 0 : index
    %c0_14 = arith.constant 0 : index
    %17 = vector.load %arg6[%c0_13, %c0_14] : memref<32x2xf32, #tpu.memory_space<vmem>>, vector<32x2xf32>
    %cst_15 = arith.constant dense<0.000000e+00> : vector<5x2xf32>
    %18 = tpu.matmul %16, %17, %cst_15 {dimension_numbers = #tpu.dot_dimension_numbers<[1], [0], [0], [1], [0, 0, 1, 1], [], []>} : vector<5x32xf32>, vector<32x2xf32>, vector<5x2xf32> -> vector<5x2xf32>
    %c0_16 = arith.constant 0 : index
    %c0_17 = arith.constant 0 : index
    %19 = vector.load %arg4[%c0_16, %c0_17] : memref<5x1xf32, #tpu.memory_space<vmem>>, vector<5x1xf32>
    %20 = vector.broadcast %19 : vector<5x1xf32> to vector<5x2xf32>
    %21 = arith.addf %18, %20 : vector<5x2xf32>
    %c0_18 = arith.constant 0 : index
    %c0_19 = arith.constant 0 : index
    %22 = vector.load %arg5[%c0_18, %c0_19] : memref<5x2xf32, #tpu.memory_space<vmem>>, vector<5x2xf32>
    tpu.vector_store %arg5[%c0_18, %c0_19], %21 {strides = array<i32>} : memref<5x2xf32, #tpu.memory_space<vmem>>, vector<5x2xf32>,
    return
  }
}

</mosaic_0001>

<llo_original>
// kernel: tpu_custom_call.1
$region0: #{tpu_custom_call.1}
  #allocation0 [shape = 'u32[]', space=smem, size = 0x4, offset = 0x4, fixed_abs, tag = 'smem constant byte address 0x4 - core index']
  #allocation1 [shape = 'u32[72,128]{1,0:T(1,128)}', space=vmem, size = 0x9000, scoped, tag = 'internal scratch']
  #allocation2 [shape = 'f32[32,2]{1,0:T(8,128)}', space=vmem, size = 0x4000, scoped, tag = 'scratch operand']
  %s0 = inlined_call_operand.hbm [shape: bf16[27,512], index: 0, kind: input, shape index: {}]
  %s1 = inlined_call_operand.vmem [shape: bf16[32,27], index: 1, kind: input, shape index: {}]
  %s2 = inlined_call_operand.vmem [shape: f32[32,1], index: 2, kind: input, shape index: {}]
  %s3 = inlined_call_operand.vmem [shape: f32[5,32], index: 3, kind: input, shape index: {}]
  %s4 = inlined_call_operand.vmem [shape: f32[5,1], index: 4, kind: input, shape index: {}]
  %s5 = inlined_call_operand.vmem [shape: f32[5,2], index: 5, kind: output, shape index: {}]
  %s6 = sld [smem:[#allocation0]]
  $region34: #{tpu_custom_call.1} parent=0
    _
  %s8 = ssub.s32 1, %s6
  %s9 = scalar_select 0, %s8, %s6
  $region1: #{tpu_custom_call.1} parent=0
    #allocation3 [shape = 'u8[32768]{0}', space=vmem, size = 0x8000, scoped, tag = 'input window, operand 0, single buffered']
    #allocation4 [shape = 's32[1]{0}', space=sflag, size = 0x4, scoped, tag = 'scoped memory for tpu_custom_call.1']
    %10 = vsyncpa [#allocation4], 0
    // Predicated region
    $region2: #{tpu_custom_call.1} parent=1 // pred_check
      _
    $region3: #{tpu_custom_call.1} parent=1 // pred_check_branch
      %12 = sbr.rel (0) target = $region5
    $region4: #{tpu_custom_call.1} parent=1 // pred_region
      %14 = vsyncadd [#allocation4], 0
      %s15 = sshll.u32 %s0, 4
      %s16 = int_to_ptr.hbm [resolvable:$true] %s15
      %s17 = sshll.u32 [#allocation3], 4
      %s18 = int_to_ptr.vmem [resolvable:$true] %s17
      %23 = dma.hbm_to_vmem [thread:$0]  %s16, 1024, %s18, [#allocation4], 256, 256, 16
    $region5: #{tpu_custom_call.1} parent=1 // pred_fallthru
      _
    // Predicated region
    $region6: #{tpu_custom_call.1} parent=1 // pred_check
      _
    $region7: #{tpu_custom_call.1} parent=1 // pred_check_branch
      %25 = sbr.rel (0) target = $region9
    $region8: #{tpu_custom_call.1} parent=1 // pred_region
      _
    $region9: #{tpu_custom_call.1} parent=1 // pred_fallthru
      _
    // Predicated region
    $region10: #{tpu_custom_call.1} parent=1 // pred_check
      _
    $region11: #{tpu_custom_call.1} parent=1 // pred_check_branch
      %27 = sbr.rel (0) target = $region13
    $region12: #{tpu_custom_call.1} parent=1 // pred_region
      _
    $region13: #{tpu_custom_call.1} parent=1 // pred_fallthru
      _
    // Predicated region
    $region14: #{tpu_custom_call.1} parent=1 // pred_check
      _
    $region15: #{tpu_custom_call.1} parent=1 // pred_check_branch
      %29 = sbr.rel (0) target = $region17
    $region16: #{tpu_custom_call.1} parent=1 // pred_region
      _
    $region17: #{tpu_custom_call.1} parent=1 // pred_fallthru
      _
    // Predicated region
    $region18: #{tpu_custom_call.1} parent=1 // pred_check
      _
    $region19: #{tpu_custom_call.1} parent=1 // pred_check_branch
      %31 = sbr.rel (0) target = $region21
    $region20: #{tpu_custom_call.1} parent=1 // pred_region
      _
    $region21: #{tpu_custom_call.1} parent=1 // pred_fallthru
      _
    // Predicated region
    $region22: #{tpu_custom_call.1} parent=1 // pred_check
      _
    $region23: #{tpu_custom_call.1} parent=1 // pred_check_branch
      %33 = sbr.rel (0) target = $region25
    $region24: #{tpu_custom_call.1} parent=1 // pred_region
      %35 = dma.done [#allocation4], 1024
    $region25: #{tpu_custom_call.1} parent=1 // pred_fallthru
      _
    %v37 = vld [vmem:[%s1] sm:$0xf]
    %v38 = vld [vmem:[%s1 + $0x4] sm:$0xf]
    %v39 = vld [vmem:[%s1 + $0x8] sm:$0xf]
    %v40 = vld [vmem:[%s1 + $0xc] sm:$0xf]
    %v41 = vld [vmem:[#allocation3] sm:$0xff]
    %v42 = vld [vmem:[#allocation3 + $0x8] sm:$0xff]
    %v43 = vld [vmem:[#allocation3 + $0x10] sm:$0xff]
    %v44 = vld [vmem:[#allocation3 + $0x18] sm:$0xff]
    %v45 = vld [vmem:[#allocation3 + $0x20] sm:$0xff]
    %v46 = vld [vmem:[#allocation3 + $0x28] sm:$0xff]
    %v47 = vld [vmem:[#allocation3 + $0x30] sm:$0x33]
    %v48 = vld [vmem:[#allocation3 + $0x38] sm:$0x33]
    %v49 = vld [vmem:[%s2] sm:$0xff]
    %v50 = vld [vmem:[%s2 + $0x8] sm:$0xff]
    %v51 = vld [vmem:[%s2 + $0x10] sm:$0xff]
    %v52 = vld [vmem:[%s2 + $0x18] sm:$0xff]
    %54 = vset.pattern.permute.xlu0 0
    %55 = vperm.xlu0 %54, %v49
    %v56 = vpop.permute.xlu0 %55
    %59 = vset.pattern.permute.xlu0 0
    %60 = vperm.xlu0 %59, %v50
    %v61 = vpop.permute.xlu0 %60
    %64 = vset.pattern.permute.xlu0 0
    %65 = vperm.xlu0 %64, %v51
    %v66 = vpop.permute.xlu0 %65
    %69 = vset.pattern.permute.xlu0 0
    %70 = vperm.xlu0 %69, %v52
    %v71 = vpop.permute.xlu0 %70
    %v77 = vunpack.c.l.b16 %v37
    %v78 = vunpack.c.l.b16 %v38
    %v79 = vunpack.c.l.b16 %v39
    %v80 = vunpack.c.l.b16 %v40
    %v81 = vpack.c.b16 %v78, %v77
    %v82 = vpack.c.b16 %v80, %v79
    %v91 = vunpack.c.l.b16 %v41
    %v92 = vunpack.c.h.b16 %v41
    %v93 = vunpack.c.l.b16 %v42
    %v94 = vunpack.c.h.b16 %v42
    %v95 = vunpack.c.l.b16 %v43
    %v96 = vunpack.c.h.b16 %v43
    %v97 = vunpack.c.l.b16 %v44
    %v98 = vunpack.c.h.b16 %v44
    %v99 = vunpack.c.l.b16 %v45
    %v100 = vunpack.c.h.b16 %v45
    %v101 = vunpack.c.l.b16 %v46
    %v102 = vunpack.c.h.b16 %v46
    %v103 = vunpack.c.l.b16 %v47
    %v104 = vunpack.c.h.b16 %v47
    %v105 = vunpack.c.l.b16 %v48
    %v106 = vunpack.c.h.b16 %v48
    %v107 = vpack.c.b16 %v95, %v91
    %v108 = vpack.c.b16 %v96, %v92
    %v109 = vpack.c.b16 %v97, %v93
    %v110 = vpack.c.b16 %v98, %v94
    %v111 = vpack.c.b16 %v103, %v99
    %v112 = vpack.c.b16 %v104, %v100
    %v113 = vpack.c.b16 %v105, %v101
    %v114 = vpack.c.b16 %v106, %v102
    %vm119 = vcmask 220160
    %v121 = vsel %vm119, %v81, 0
    %v124 = vsel %vm119, %v82, 0
    %vm126 = vcmask 1044480
    %vm127 = vcmask 1045504
    %v128 = vsel %vm126, 4294967295, 65535
    %v129 = vsel %vm127, %v128, 0
    %v131 = vand.u32 %v111, %v129
    %v134 = vand.u32 %v112, %v129
    %v137 = vand.u32 %v113, %v129
    %v140 = vand.u32 %v114, %v129
    %142 = vmatpush.bf16.msra.mxu0 0
    %143 = vmatpush.bf16.msra.mxu0 0
    %144 = vmatpush.bf16.msra.mxu0 0
    %145 = vmatpush.bf16.msra.mxu0 0
    %146 = vmatpush.bf16.msra.mxu0 0
    %147 = vmatpush.bf16.msra.mxu0 0
    %148 = vmatpush.bf16.msra.mxu0 %v131
    %149 = vmatpush.bf16.msra.mxu0 %v107
    %150 = vmatmul.bf16.gmra.mxu0 %v121
    %v151 = vpop.f32.mrf.mxu0
    %v152 = vadd.f32 %v56, %v151
    %v153 = vpop.f32.mrf.mxu0
    %v154 = vadd.f32 %v61, %v153
    %155 = vmatmul.bf16.gmra.mxu0 %v124
    %v156 = vpop.f32.mrf.mxu0
    %v157 = vadd.f32 %v66, %v156
    %v158 = vpop.f32.mrf.mxu0
    %v159 = vadd.f32 %v71, %v158
    %160 = vdwg.mxu0
    %161 = vmatpush.bf16.msra.mxu0 0
    %162 = vmatpush.bf16.msra.mxu0 0
    %163 = vmatpush.bf16.msra.mxu0 0
    %164 = vmatpush.bf16.msra.mxu0 0
    %165 = vmatpush.bf16.msra.mxu0 0
    %166 = vmatpush.bf16.msra.mxu0 0
    %167 = vmatpush.bf16.msra.mxu0 %v134
    %168 = vmatpush.bf16.msra.mxu0 %v108
    %169 = vmatmul.bf16.gmra.mxu0 %v121
    %v170 = vpop.f32.mrf.mxu0
    %v171 = vadd.f32 %v56, %v170
    %v172 = vpop.f32.mrf.mxu0
    %v173 = vadd.f32 %v61, %v172
    %174 = vmatmul.bf16.gmra.mxu0 %v124
    %v175 = vpop.f32.mrf.mxu0
    %v176 = vadd.f32 %v66, %v175
    %v177 = vpop.f32.mrf.mxu0
    %v178 = vadd.f32 %v71, %v177
    %179 = vdwg.mxu0
    %180 = vmatpush.bf16.msra.mxu0 0
    %181 = vmatpush.bf16.msra.mxu0 0
    %182 = vmatpush.bf16.msra.mxu0 0
    %183 = vmatpush.bf16.msra.mxu0 0
    %184 = vmatpush.bf16.msra.mxu0 0
    %185 = vmatpush.bf16.msra.mxu0 0
    %186 = vmatpush.bf16.msra.mxu0 %v137
    %187 = vmatpush.bf16.msra.mxu0 %v109
    %188 = vmatmul.bf16.gmra.mxu0 %v121
    %v189 = vpop.f32.mrf.mxu0
    %v190 = vadd.f32 %v56, %v189
    %v191 = vpop.f32.mrf.mxu0
    %v192 = vadd.f32 %v61, %v191
    %193 = vmatmul.bf16.gmra.mxu0 %v124
    %v194 = vpop.f32.mrf.mxu0
    %v195 = vadd.f32 %v66, %v194
    %v196 = vpop.f32.mrf.mxu0
    %v197 = vadd.f32 %v71, %v196
    %198 = vdwg.mxu0
    %199 = vmatpush.bf16.msra.mxu0 0
    %200 = vmatpush.bf16.msra.mxu0 0
    %201 = vmatpush.bf16.msra.mxu0 0
    %202 = vmatpush.bf16.msra.mxu0 0
    %203 = vmatpush.bf16.msra.mxu0 0
    %204 = vmatpush.bf16.msra.mxu0 0
    %205 = vmatpush.bf16.msra.mxu0 %v140
    %206 = vmatpush.bf16.msra.mxu0 %v110
    %207 = vmatmul.bf16.gmra.mxu0 %v121
    %v208 = vpop.f32.mrf.mxu0
    %v209 = vadd.f32 %v56, %v208
    %v210 = vpop.f32.mrf.mxu0
    %v211 = vadd.f32 %v61, %v210
    %212 = vmatmul.bf16.gmra.mxu0 %v124
    %v213 = vpop.f32.mrf.mxu0
    %v214 = vadd.f32 %v66, %v213
    %v215 = vpop.f32.mrf.mxu0
    %v216 = vadd.f32 %v71, %v215
    %217 = vdwg.mxu0
    %v218 = vmax.f32 %v152, 0.0
    %v219 = vmax.f32 %v171, 0.0
    %v220 = vmax.f32 %v190, 0.0
    %v221 = vmax.f32 %v209, 0.0
    %v222 = vmax.f32 %v154, 0.0
    %v223 = vmax.f32 %v173, 0.0
    %v224 = vmax.f32 %v192, 0.0
    %v225 = vmax.f32 %v211, 0.0
    %v226 = vmax.f32 %v157, 0.0
    %v227 = vmax.f32 %v176, 0.0
    %v228 = vmax.f32 %v195, 0.0
    %v229 = vmax.f32 %v214, 0.0
    %v230 = vmax.f32 %v159, 0.0
    %v231 = vmax.f32 %v178, 0.0
    %v232 = vmax.f32 %v197, 0.0
    %v233 = vmax.f32 %v216, 0.0
    %v234 = vadd.f32 %v218, %v219
    %235 = vadd.xlane.f32.xlu0 %v234
    %v236 = vpop.xlane.xlu0 %235
    %v237 = vadd.f32 %v222, %v223
    %238 = vadd.xlane.f32.xlu0 %v237
    %v239 = vpop.xlane.xlu0 %238
    %v240 = vadd.f32 %v226, %v227
    %241 = vadd.xlane.f32.xlu0 %v240
    %v242 = vpop.xlane.xlu0 %241
    %v243 = vadd.f32 %v230, %v231
    %244 = vadd.xlane.f32.xlu0 %v243
    %v245 = vpop.xlane.xlu0 %244
    %vm246 = vcmask 7168
    %247 = vst.msk [vmem:[#allocation2] sm:$0xff] %vm246, %v236
    %248 = vst.msk [vmem:[#allocation2 + $0x8] sm:$0xff] %vm246, %v239
    %249 = vst.msk [vmem:[#allocation2 + $0x10] sm:$0xff] %vm246, %v242
    %250 = vst.msk [vmem:[#allocation2 + $0x18] sm:$0xff] %vm246, %v245
    %v251 = vadd.f32 %v220, %v221
    %252 = vadd.xlane.f32.xlu0 %v251
    %v253 = vpop.xlane.xlu0 %252
    %v254 = vadd.f32 %v224, %v225
    %255 = vadd.xlane.f32.xlu0 %v254
    %v256 = vpop.xlane.xlu0 %255
    %v257 = vadd.f32 %v228, %v229
    %258 = vadd.xlane.f32.xlu0 %v257
    %v259 = vpop.xlane.xlu0 %258
    %v260 = vadd.f32 %v232, %v233
    %261 = vadd.xlane.f32.xlu0 %v260
    %v262 = vpop.xlane.xlu0 %261
    %vm263 = vcmask 15368
    %264 = vst.msk [vmem:[#allocation2] sm:$0xff] %vm263, %v253
    %265 = vst.msk [vmem:[#allocation2 + $0x8] sm:$0xff] %vm263, %v256
    %266 = vst.msk [vmem:[#allocation2 + $0x10] sm:$0xff] %vm263, %v259
    %267 = vst.msk [vmem:[#allocation2 + $0x18] sm:$0xff] %vm263, %v262
    %v268 = vld [vmem:[%s3] sm:$0x1f]
    %v269 = vld [vmem:[#allocation2] sm:$0xff]
    %v270 = vld [vmem:[#allocation2 + $0x8] sm:$0xff]
    %v271 = vld [vmem:[#allocation2 + $0x10] sm:$0xff]
    %v272 = vld [vmem:[#allocation2 + $0x18] sm:$0xff]
    %v273 = vld [vmem:[%s4] sm:$0x1f]
    %275 = vset.pattern.permute.xlu0 0
    %276 = vperm.xlu0 %275, %v273
    %v277 = vpop.permute.xlu0 %276
    %vm279 = vcmask 261120
    %v281 = vsel %vm279, %v268, 0
    %283 = vmatpush.msra.mxu0 0.0
    %284 = vmatpush.msra.mxu0 0.0
    %285 = vmatpush.msra.mxu0 0.0
    %286 = vmatpush.msra.mxu0 0.0
    %287 = vmatpush.msra.mxu0 0.0
    %288 = vmatpush.msra.mxu0 0.0
    %289 = vmatpush.msra.mxu0 0.0
    %290 = vmatpush.msra.mxu0 0.0
    %291 = vmatpush.msra.mxu0 0.0
    %292 = vmatpush.msra.mxu0 0.0
    %293 = vmatpush.msra.mxu0 0.0
    %294 = vmatpush.msra.mxu0 0.0
    %295 = vmatpush.msra.mxu0 %v272
    %296 = vmatpush.msra.mxu0 %v271
    %297 = vmatpush.msra.mxu0 %v270
    %298 = vmatpush.msra.mxu0 %v269
    %299 = vmatmul.f32.gmra.mxu0 %v281
    %v300 = vpop.f32.mrf.mxu0
    %v301 = vadd.f32 %v277, %v300
    %302 = vdwg.mxu0
    %vm303 = vcmask 12288
    %304 = vst.msk [vmem:[%s5] sm:$0x1f] %vm303, %v301
    // Predicated region
    $region26: #{tpu_custom_call.1} parent=1 // pred_check
      _
    $region27: #{tpu_custom_call.1} parent=1 // pred_check_branch
      %306 = sbr.rel (0) target = $region29
    $region28: #{tpu_custom_call.1} parent=1 // pred_region
      _
    $region29: #{tpu_custom_call.1} parent=1 // pred_fallthru
      _
    // Predicated region
    $region30: #{tpu_custom_call.1} parent=1 // pred_check
      _
    $region31: #{tpu_custom_call.1} parent=1 // pred_check_branch
      %308 = sbr.rel (0) target = $region33
    $region32: #{tpu_custom_call.1} parent=1 // pred_region
      _
    $region33: #{tpu_custom_call.1} parent=1 // pred_fallthru
      _
    %309 = vsyncpa [#allocation4], 1

</llo_original>
